<compile_context>
chip_gen: v5e
topology: v5e:2x2
jax: 0.10.0
libtpu: 0.0.40
codegen_flags: <defaults>
</compile_context>

<pallas_src>
import functools
from typing import NamedTuple

import jax
import jax.numpy as jnp
from jax.experimental import pallas as pl
from jax.experimental.pallas import tpu as pltpu


def _round_up(a, b):
    return (a + b - 1) // b * b


def _vmem_capacity_bytes():
    try:
        return int(pltpu.get_tpu_info().vmem_capacity_bytes)
    except Exception:
        # Conservative fallback (v7x per-TensorCore size) if the query fails.
        return 64 << 20


def _choose_tile_n(n, requested, vmem_cap_bytes):
    """Pick a sublane-aligned row tile; avoid padding x when possible."""
    if requested is None:
        requested = 1024 if vmem_cap_bytes >= (96 << 20) else 512
    tile_n = max(8, (int(requested) // 8) * 8)          # multiple of 8
    tile_n = min(tile_n, _round_up(n, 8))
    if n % tile_n != 0:
        # Prefer a slightly smaller tile that divides n exactly (skips jnp.pad).
        for cand in range(tile_n, max(8, tile_n // 2) - 1, -8):
            if n % cand == 0:
                tile_n = cand
                break
    n_pad = _round_up(n, tile_n)
    # If everything fits one tile, split it so both v7x TensorCores get work.
    if n_pad // tile_n == 1 and tile_n >= 16 and tile_n % 16 == 0:
        tile_n //= 2
    return tile_n, n_pad


def _make_resident_spec(block_shape, index_map, single_buffer):
    """Constant-index (resident) BlockSpec, single-buffered when supported."""
    if single_buffer:
        return pl.BlockSpec(block_shape, index_map, pipeline_mode=pl.Buffered(1))
    return pl.BlockSpec(block_shape, index_map)


# ----------------------------- kernels ------------------------------------ #

def linffn_kernel(x_ref, w1_ref, b1_ref, w2_ref, b2_ref, o_ref, *,
                  compute_dtype):
    # In-kernel cast of x (f32 -> bf16) on the VPU; rides under the MXU.
    x = x_ref[...].astype(compute_dtype)
    # (tile_n, H) @ (H, H/2_pad) on the MXU, f32 accumulation.
    h = jnp.dot(x, w1_ref[...], preferred_element_type=jnp.float32)
    # Bias + ReLU on the VPU in f32.
    h = jnp.maximum(h + b1_ref[...], 0.0)
    # (tile_n, H/2_pad) @ (H/2_pad, T_pad), f32 accumulation.
    out = jnp.dot(h.astype(compute_dtype), w2_ref[...],
                  preferred_element_type=jnp.float32)
    o_ref[...] = (out + b2_ref[...]).astype(o_ref.dtype)


def linffn_kblocked_kernel(x_ref, w1_ref, b1_ref, w2_ref, b2_ref, o_ref,
                           h_acc, *, compute_dtype):
    k = pl.program_id(1)

    @pl.when(k == 0)
    def _():
        h_acc[...] = jnp.zeros_like(h_acc)

    x = x_ref[...].astype(compute_dtype)
    h_acc[...] += jnp.dot(x, w1_ref[...], preferred_element_type=jnp.float32)

    @pl.when(k == pl.num_programs(1) - 1)
    def _():
        h = jnp.maximum(h_acc[...] + b1_ref[...], 0.0)
        out = jnp.dot(h.astype(compute_dtype), w2_ref[...],
                      preferred_element_type=jnp.float32)
        o_ref[...] = (out + b2_ref[...]).astype(o_ref.dtype)


# ----------------------------- parameters --------------------------------- #

class LinFFNParams(NamedTuple):
    w1: jax.Array   # (hidden, half_pad)  compute dtype
    b1: jax.Array   # (1, half_pad)       float32
    w2: jax.Array   # (half_pad, t_pad)   compute dtype
    b2: jax.Array   # (1, t_pad)          float32


def prepare_linffn_params(w1, b1, w2, b2, *, compute_dtype=jnp.bfloat16):
    """One-time cast + lane padding of LinFFN weights (hoisted out of forward).

    w1: (H, H/2), b1: (H/2,), w2: (H/2, T), b2: (T,) in (in, out) layout.
    H/2 and T are zero-padded to multiples of 128; exact w.r.t. the original
    math (padded hidden columns give relu(0 + 0) = 0 and multiply zero rows of
    the padded w2).
    """
    hidden, half = w1.shape
    target = w2.shape[1]
    half_p = _round_up(half, 128)
    t_pad = _round_up(target, 128)

    w1p = jnp.pad(w1, ((0, 0), (0, half_p - half))).astype(compute_dtype)
    b1p = jnp.pad(b1, ((0, half_p - half),)).astype(jnp.float32).reshape(1, half_p)
    w2p = jnp.pad(w2, ((0, half_p - half), (0, t_pad - target))).astype(compute_dtype)
    b2p = jnp.pad(b2, ((0, t_pad - target),)).astype(jnp.float32).reshape(1, t_pad)
    return LinFFNParams(w1=w1p, b1=b1p, w2=w2p, b2=b2p)


def init_linffn_params(key, hidden_dim, target_size=1, dtype=jnp.float32):
    """Deterministic init mimicking torch.nn.Linear (uniform +/- 1/sqrt(fan_in)).
    Weights are returned already transposed to (in, out). Matches the PyTorch
    module's int(hidden_dim / 2) hidden width."""
    half = int(hidden_dim / 2)
    k1, k2, k3, k4 = jax.random.split(key, 4)

    bound1 = 1.0 / jnp.sqrt(hidden_dim)
    w1 = jax.random.uniform(k1, (hidden_dim, half), dtype,
                            minval=-bound1, maxval=bound1)
    b1 = jax.random.uniform(k2, (half,), dtype, minval=-bound1, maxval=bound1)

    bound2 = 1.0 / jnp.sqrt(half)
    w2 = jax.random.uniform(k3, (half, target_size), dtype,
                            minval=-bound2, maxval=bound2)
    b2 = jax.random.uniform(k4, (target_size,), dtype,
                            minval=-bound2, maxval=bound2)
    return w1, b1, w2, b2


# ----------------------------- forward ------------------------------------ #

def linffn_forward(x, params, *, target_size, tile_n=None, tile_k=None,
                   core_parallel=False):
    """Fused Linear(H -> H/2) -> ReLU -> Linear(H/2 -> target_size).

    x: (..., H) (f32 or bf16); params from prepare_linffn_params().
    """
    w1c, b1c, w2c, b2c = params
    hidden, half_p = w1c.shape
    t_pad = w2c.shape[1]
    target = int(target_size)
    compute_dtype = w1c.dtype
    out_dtype = x.dtype

    orig_shape = x.shape
    x2d = x.reshape(-1, hidden)
    n = x2d.shape[0]

    vmem_cap = _vmem_capacity_bytes()
    vmem_budget = max(int(vmem_cap * 0.8), 16 << 20)

    x_itemsize = jnp.dtype(x.dtype).itemsize
    c_itemsize = jnp.dtype(compute_dtype).itemsize
    # Padded output writeback is cheapest in the compute dtype (halves bytes).
    store_dtype = compute_dtype if t_pad != target else out_dtype
    s_itemsize = jnp.dtype(store_dtype).itemsize

    tile_n, n_pad = _choose_tile_n(n, tile_n, vmem_cap)

    resident_bytes = ((hidden * half_p + half_p * t_pad) * c_itemsize
                      + (half_p + t_pad) * 4)

    def _resident_vmem(tn):
        return (resident_bytes                                   # single-buffered
                + 2 * tn * (hidden * x_itemsize + t_pad * s_itemsize)
                + tn * (half_p + t_pad) * 4                      # f32 intermediates
                + (2 << 20))                                     # Mosaic scratch headroom

    def _blocked_vmem(tn, tk):
        return (half_p * t_pad * c_itemsize + (half_p + t_pad) * 4
                + 2 * tn * (tk * x_itemsize + t_pad * s_itemsize)
                + 2 * tk * half_p * c_itemsize
                + tn * half_p * 4                                # f32 accumulator
                + tn * t_pad * 4
                + (2 << 20))

    # Decide between resident-w1 and K-blocked paths.
    use_kblock = tile_k is not None
    if not use_kblock and _resident_vmem(tile_n) > vmem_budget:
        if hidden % 128 == 0 and hidden > 128:
            use_kblock = True
        else:
            while _resident_vmem(tile_n) > vmem_budget and tile_n > 8:
                tile_n = max(8, ((tile_n // 2) // 8) * 8)
            n_pad = _round_up(n, tile_n)

    num_k = 1
    if use_kblock:
        if tile_k is None:
            tile_k = min(hidden, 512)
            while hidden % tile_k != 0:
                tile_k -= 128
        if tile_k % 128 != 0 or hidden % tile_k != 0:
            raise ValueError(
                f"tile_k={tile_k} must be a multiple of 128 that divides hidden={hidden}")
        while _blocked_vmem(tile_n, tile_k) > vmem_budget and tile_n > 8:
            tile_n = max(8, ((tile_n // 2) // 8) * 8)
        n_pad = _round_up(n, tile_n)
        num_k = hidden // tile_k

    num_tiles = n_pad // tile_n
    if n_pad != n:
        x2d = jnp.pad(x2d, ((0, n_pad - n), (0, 0)))

    vmem_needed = _blocked_vmem(tile_n, tile_k) if use_kblock else _resident_vmem(tile_n)
    vmem_limit = int(min(max(vmem_needed, 16 << 20), vmem_budget))

    n_axis_sem = pltpu.CORE_PARALLEL if core_parallel else "parallel"

    cost = pl.CostEstimate(
        flops=2 * n_pad * hidden * half_p + 2 * n_pad * half_p * t_pad,
        transcendentals=0,
        bytes_accessed=(n_pad * hidden * x_itemsize + resident_bytes
                        + n_pad * t_pad * s_itemsize))

    def _run(single_buffer_resident):
        def rspec(shape, imap):
            return _make_resident_spec(shape, imap, single_buffer_resident)

        if not use_kblock:
            return pl.pallas_call(
                functools.partial(linffn_kernel, compute_dtype=compute_dtype),
                out_shape=jax.ShapeDtypeStruct((n_pad, t_pad), store_dtype),
                grid_spec=pltpu.PrefetchScalarGridSpec(
                    num_scalar_prefetch=0,
                    grid=(num_tiles,),
                    in_specs=[
                        pl.BlockSpec((tile_n, hidden), lambda i: (i, 0)),  # x (streamed)
                        rspec((hidden, half_p), lambda i: (0, 0)),         # w1 (resident)
                        rspec((1, half_p), lambda i: (0, 0)),              # b1 (resident)
                        rspec((half_p, t_pad), lambda i: (0, 0)),          # w2 (resident)
                        rspec((1, t_pad), lambda i: (0, 0)),               # b2 (resident)
                    ],
                    out_specs=pl.BlockSpec((tile_n, t_pad), lambda i: (i, 0)),
                ),
                compiler_params=pltpu.CompilerParams(
                    dimension_semantics=(n_axis_sem,),
                    vmem_limit_bytes=vmem_limit),
                cost_estimate=cost,
            )(x2d, w1c, b1c, w2c, b2c)

        return pl.pallas_call(
            functools.partial(linffn_kblocked_kernel, compute_dtype=compute_dtype),
            out_shape=jax.ShapeDtypeStruct((n_pad, t_pad), store_dtype),
            grid_spec=pltpu.PrefetchScalarGridSpec(
                num_scalar_prefetch=0,
                grid=(num_tiles, num_k),
                in_specs=[
                    pl.BlockSpec((tile_n, tile_k), lambda i, k: (i, k)),   # x (streamed)
                    pl.BlockSpec((tile_k, half_p), lambda i, k: (k, 0)),   # w1 (K-blocked)
                    rspec((1, half_p), lambda i, k: (0, 0)),               # b1 (resident)
                    rspec((half_p, t_pad), lambda i, k: (0, 0)),           # w2 (resident)
                    rspec((1, t_pad), lambda i, k: (0, 0)),                # b2 (resident)
                ],
                out_specs=pl.BlockSpec((tile_n, t_pad), lambda i, k: (i, 0)),
                scratch_shapes=[pltpu.VMEM((tile_n, half_p), jnp.float32)],
            ),
            compiler_params=pltpu.CompilerParams(
                dimension_semantics=(n_axis_sem, "arbitrary"),
                vmem_limit_bytes=vmem_limit),
            cost_estimate=cost,
        )(x2d, w1c, b1c, w2c, b2c)

    try:
        out = _run(True)
    except Exception:
        # Fallback for jax versions without single-buffered resident blocks.
        out = _run(False)

    out = out[:n, :target].astype(out_dtype)
    return out.reshape(orig_shape[:-1] + (target,))


# ----------------------------- test --------------------------------------- #

def _reference_matched(x, w1, b1, w2, b2, out_dtype, round_store=True):
    """Reference with matched bf16-input / f32-accumulate arithmetic."""
    hidden = x.shape[-1]
    xb = x.astype(jnp.bfloat16).reshape(-1, hidden)
    h = jnp.dot(xb, w1.astype(jnp.bfloat16),
                preferred_element_type=jnp.float32) + b1
    h = jnp.maximum(h, 0.0)
    o = jnp.dot(h.astype(jnp.bfloat16), w2.astype(jnp.bfloat16),
                preferred_element_type=jnp.float32) + b2
    if round_store:   # kernel stores the padded output in bf16
        o = o.astype(jnp.bfloat16)
    o = o.astype(out_dtype)
    return o.reshape(x.shape[:-1] + (w2.shape[1],))


if __name__ == "__main__":
    key = jax.random.PRNGKey(0)
    k_in, k_p, k_in2, k_p2 = jax.random.split(key, 4)

    # --- Case 1: resident-weight path (small hidden). ---
    batch, seq, hidden_dim, target_size = 2, 8, 32, 1
    x = jax.random.normal(k_in, (batch, seq, hidden_dim), jnp.float32)
    w1, b1, w2, b2 = init_linffn_params(k_p, hidden_dim, target_size)
    params = prepare_linffn_params(w1, b1, w2, b2)

    out = jax.block_until_ready(linffn_forward(x, params, target_size=target_size))
    assert out.shape == (batch, seq, target_size)
    assert out.dtype == x.dtype

    ref = _reference_matched(x, w1, b1, w2, b2, out.dtype)
    assert jnp.allclose(out, ref, atol=2e-2, rtol=2e-2)

    ref_f32 = jnp.maximum(x @ w1 + b1, 0.0) @ w2 + b2
    assert jnp.allclose(out, ref_f32, atol=5e-2, rtol=5e-2)

    # --- Case 2: exercise the K-blocked (hidden reduction) path. ---
    hidden_dim2 = 256
    x2 = jax.random.normal(k_in2, (batch, seq, hidden_dim2), jnp.float32)
    w1b, b1b, w2b, b2b = init_linffn_params(k_p2, hidden_dim2, target_size)
    params2 = prepare_linffn_params(w1b, b1b, w2b, b2b)

    out2 = jax.block_until_ready(
        linffn_forward(x2, params2, target_size=target_size, tile_k=128))
    assert out2.shape == (batch, seq, target_size)

    ref2 = _reference_matched(x2, w1b, b1b, w2b, b2b, out2.dtype)
    assert jnp.allclose(out2, ref2, atol=2e-2, rtol=2e-2)
    ref2_f32 = jnp.maximum(x2 @ w1b + b1b, 0.0) @ w2b + b2b
    assert jnp.allclose(out2, ref2_f32, atol=5e-2, rtol=5e-2)

    print("KERNEL_OK")
</pallas_src>

<mosaic_0001>
module attributes {stable_mosaic.version = 11 : i64} {
  func.func @linffn_kernel(%arg0: i32, %arg1: memref<8x32xf32, #tpu.memory_space<vmem>>, %arg2: memref<32x128xbf16, #tpu.memory_space<vmem>>, %arg3: memref<1x128xf32, #tpu.memory_space<vmem>>, %arg4: memref<128x128xbf16, #tpu.memory_space<vmem>>, %arg5: memref<1x128xf32, #tpu.memory_space<vmem>>, %arg6: memref<8x128xbf16, #tpu.memory_space<vmem>>) attributes {dimension_semantics = [#tpu.dimension_semantics<parallel>], iteration_bounds = array<i64: 2>, scalar_prefetch = 0 : i64, scratch_operands = 0 : i64, tpu.core_type = #tpu.core_type<tc>, window_params = [{transform_indices = @transform_0, window_bounds = array<i64: 8, 32>}, {pipeline_mode = #tpu.pipeline_mode<synchronous>, transform_indices = @transform_1, window_bounds = array<i64: 32, 128>}, {pipeline_mode = #tpu.pipeline_mode<synchronous>, transform_indices = @transform_2, window_bounds = array<i64: 1, 128>}, {pipeline_mode = #tpu.pipeline_mode<synchronous>, transform_indices = @transform_3, window_bounds = array<i64: 128, 128>}, {pipeline_mode = #tpu.pipeline_mode<synchronous>, transform_indices = @transform_4, window_bounds = array<i64: 1, 128>}, {transform_indices = @transform_5, window_bounds = array<i64: 8, 128>}]} {
    %c0 = arith.constant 0 : index
    %c0_0 = arith.constant 0 : index
    %0 = vector.load %arg1[%c0, %c0_0] : memref<8x32xf32, #tpu.memory_space<vmem>>, vector<8x32xf32>
    %1 = arith.truncf %0 : vector<8x32xf32> to vector<8x32xbf16>
    %c0_1 = arith.constant 0 : index
    %c0_2 = arith.constant 0 : index
    %2 = vector.load %arg2[%c0_1, %c0_2] : memref<32x128xbf16, #tpu.memory_space<vmem>>, vector<32x128xbf16>
    %cst = arith.constant dense<0.000000e+00> : vector<8x128xf32>
    %3 = tpu.matmul %1, %2, %cst {dimension_numbers = #tpu.dot_dimension_numbers<[1], [0], [0], [1], [0, 0, 1, 1], [], []>} : vector<8x32xbf16>, vector<32x128xbf16>, vector<8x128xf32> -> vector<8x128xf32>
    %c0_3 = arith.constant 0 : index
    %c0_4 = arith.constant 0 : index
    %4 = vector.load %arg3[%c0_3, %c0_4] : memref<1x128xf32, #tpu.memory_space<vmem>>, vector<1x128xf32>
    %5 = vector.broadcast %4 : vector<1x128xf32> to vector<8x128xf32>
    %6 = arith.addf %3, %5 : vector<8x128xf32>
    %cst_5 = arith.constant 0.000000e+00 : f32
    %7 = vector.broadcast %cst_5 : f32 to vector<8x128xf32>
    %8 = arith.maximumf %6, %7 : vector<8x128xf32>
    %9 = arith.truncf %8 : vector<8x128xf32> to vector<8x128xbf16>
    %c0_6 = arith.constant 0 : index
    %c0_7 = arith.constant 0 : index
    %10 = vector.load %arg4[%c0_6, %c0_7] : memref<128x128xbf16, #tpu.memory_space<vmem>>, vector<128x128xbf16>
    %cst_8 = arith.constant dense<0.000000e+00> : vector<8x128xf32>
    %11 = tpu.matmul %9, %10, %cst_8 {dimension_numbers = #tpu.dot_dimension_numbers<[1], [0], [0], [1], [0, 0, 1, 1], [], []>} : vector<8x128xbf16>, vector<128x128xbf16>, vector<8x128xf32> -> vector<8x128xf32>
    %c0_9 = arith.constant 0 : index
    %c0_10 = arith.constant 0 : index
    %12 = vector.load %arg5[%c0_9, %c0_10] : memref<1x128xf32, #tpu.memory_space<vmem>>, vector<1x128xf32>
    %13 = vector.broadcast %12 : vector<1x128xf32> to vector<8x128xf32>
    %14 = arith.addf %11, %13 : vector<8x128xf32>
    %15 = arith.truncf %14 : vector<8x128xf32> to vector<8x128xbf16>
    %c0_11 = arith.constant 0 : index
    %c0_12 = arith.constant 0 : index
    %16 = vector.load %arg6[%c0_11, %c0_12] : memref<8x128xbf16, #tpu.memory_space<vmem>>, vector<8x128xbf16>
    tpu.vector_store %arg6[%c0_11, %c0_12], %15 {strides = array<i32>} : memref<8x128xbf16, #tpu.memory_space<vmem>>, vector<8x128xbf16>,
    return
  }
  func.func @transform_0(%arg0: i32) -> (i32, i32) {
    %c0_i32 = arith.constant 0 : i32
    %c0_i32_0 = arith.constant 0 : i32
    return %arg0, %c0_i32 : i32, i32
  }
  func.func @transform_1(%arg0: i32) -> (i32, i32) {
    %c0_i32 = arith.constant 0 : i32
    %c0_i32_0 = arith.constant 0 : i32
    %c0_i32_1 = arith.constant 0 : i32
    return %c0_i32, %c0_i32_0 : i32, i32
  }
  func.func @transform_2(%arg0: i32) -> (i32, i32) {
    %c0_i32 = arith.constant 0 : i32
    %c0_i32_0 = arith.constant 0 : i32
    %c0_i32_1 = arith.constant 0 : i32
    return %c0_i32, %c0_i32_0 : i32, i32
  }
  func.func @transform_3(%arg0: i32) -> (i32, i32) {
    %c0_i32 = arith.constant 0 : i32
    %c0_i32_0 = arith.constant 0 : i32
    %c0_i32_1 = arith.constant 0 : i32
    return %c0_i32, %c0_i32_0 : i32, i32
  }
  func.func @transform_4(%arg0: i32) -> (i32, i32) {
    %c0_i32 = arith.constant 0 : i32
    %c0_i32_0 = arith.constant 0 : i32
    %c0_i32_1 = arith.constant 0 : i32
    return %c0_i32, %c0_i32_0 : i32, i32
  }
  func.func @transform_5(%arg0: i32) -> (i32, i32) {
    %c0_i32 = arith.constant 0 : i32
    %c0_i32_0 = arith.constant 0 : i32
    return %arg0, %c0_i32 : i32, i32
  }
}

module attributes {stable_mosaic.version = 11 : i64} {
  func.func @linffn_kernel(%arg0: i32, %arg1: memref<8x32xf32, #tpu.memory_space<vmem>>, %arg2: memref<32x128xbf16, #tpu.memory_space<vmem>>, %arg3: memref<1x128xf32, #tpu.memory_space<vmem>>, %arg4: memref<128x128xbf16, #tpu.memory_space<vmem>>, %arg5: memref<1x128xf32, #tpu.memory_space<vmem>>, %arg6: memref<8x128xbf16, #tpu.memory_space<vmem>>) attributes {dimension_semantics = [#tpu.dimension_semantics<parallel>], iteration_bounds = array<i64: 2>, scalar_prefetch = 0 : i64, scratch_operands = 0 : i64, tpu.core_type = #tpu.core_type<tc>, window_params = [{transform_indices = @transform_0, window_bounds = array<i64: 8, 32>}, {pipeline_mode = #tpu.pipeline_mode<synchronous>, transform_indices = @transform_1, window_bounds = array<i64: 32, 128>}, {pipeline_mode = #tpu.pipeline_mode<synchronous>, transform_indices = @transform_2, window_bounds = array<i64: 1, 128>}, {pipeline_mode = #tpu.pipeline_mode<synchronous>, transform_indices = @transform_3, window_bounds = array<i64: 128, 128>}, {pipeline_mode = #tpu.pipeline_mode<synchronous>, transform_indices = @transform_4, window_bounds = array<i64: 1, 128>}, {transform_indices = @transform_5, window_bounds = array<i64: 8, 128>}]} {
    %c0 = arith.constant 0 : index
    %c0_0 = arith.constant 0 : index
    %0 = vector.load %arg1[%c0, %c0_0] : memref<8x32xf32, #tpu.memory_space<vmem>>, vector<8x32xf32>
    %1 = arith.truncf %0 : vector<8x32xf32> to vector<8x32xbf16>
    %c0_1 = arith.constant 0 : index
    %c0_2 = arith.constant 0 : index
    %2 = vector.load %arg2[%c0_1, %c0_2] : memref<32x128xbf16, #tpu.memory_space<vmem>>, vector<32x128xbf16>
    %cst = arith.constant dense<0.000000e+00> : vector<8x128xf32>
    %3 = tpu.matmul %1, %2, %cst {dimension_numbers = #tpu.dot_dimension_numbers<[1], [0], [0], [1], [0, 0, 1, 1], [], []>} : vector<8x32xbf16>, vector<32x128xbf16>, vector<8x128xf32> -> vector<8x128xf32>
    %c0_3 = arith.constant 0 : index
    %c0_4 = arith.constant 0 : index
    %4 = vector.load %arg3[%c0_3, %c0_4] : memref<1x128xf32, #tpu.memory_space<vmem>>, vector<1x128xf32>
    %5 = vector.broadcast %4 : vector<1x128xf32> to vector<8x128xf32>
    %6 = arith.addf %3, %5 : vector<8x128xf32>
    %cst_5 = arith.constant 0.000000e+00 : f32
    %7 = vector.broadcast %cst_5 : f32 to vector<8x128xf32>
    %8 = arith.maximumf %6, %7 : vector<8x128xf32>
    %9 = arith.truncf %8 : vector<8x128xf32> to vector<8x128xbf16>
    %c0_6 = arith.constant 0 : index
    %c0_7 = arith.constant 0 : index
    %10 = vector.load %arg4[%c0_6, %c0_7] : memref<128x128xbf16, #tpu.memory_space<vmem>>, vector<128x128xbf16>
    %cst_8 = arith.constant dense<0.000000e+00> : vector<8x128xf32>
    %11 = tpu.matmul %9, %10, %cst_8 {dimension_numbers = #tpu.dot_dimension_numbers<[1], [0], [0], [1], [0, 0, 1, 1], [], []>} : vector<8x128xbf16>, vector<128x128xbf16>, vector<8x128xf32> -> vector<8x128xf32>
    %c0_9 = arith.constant 0 : index
    %c0_10 = arith.constant 0 : index
    %12 = vector.load %arg5[%c0_9, %c0_10] : memref<1x128xf32, #tpu.memory_space<vmem>>, vector<1x128xf32>
    %13 = vector.broadcast %12 : vector<1x128xf32> to vector<8x128xf32>
    %14 = arith.addf %11, %13 : vector<8x128xf32>
    %15 = arith.truncf %14 : vector<8x128xf32> to vector<8x128xbf16>
    %c0_11 = arith.constant 0 : index
    %c0_12 = arith.constant 0 : index
    %16 = vector.load %arg6[%c0_11, %c0_12] : memref<8x128xbf16, #tpu.memory_space<vmem>>, vector<8x128xbf16>
    tpu.vector_store %arg6[%c0_11, %c0_12], %15 {strides = array<i32>} : memref<8x128xbf16, #tpu.memory_space<vmem>>, vector<8x128xbf16>,
    return
  }
  func.func @transform_0(%arg0: i32) -> (i32, i32) {
    %c0_i32 = arith.constant 0 : i32
    %c0_i32_0 = arith.constant 0 : i32
    return %arg0, %c0_i32 : i32, i32
  }
  func.func @transform_1(%arg0: i32) -> (i32, i32) {
    %c0_i32 = arith.constant 0 : i32
    %c0_i32_0 = arith.constant 0 : i32
    %c0_i32_1 = arith.constant 0 : i32
    return %c0_i32, %c0_i32_0 : i32, i32
  }
  func.func @transform_2(%arg0: i32) -> (i32, i32) {
    %c0_i32 = arith.constant 0 : i32
    %c0_i32_0 = arith.constant 0 : i32
    %c0_i32_1 = arith.constant 0 : i32
    return %c0_i32, %c0_i32_0 : i32, i32
  }
  func.func @transform_3(%arg0: i32) -> (i32, i32) {
    %c0_i32 = arith.constant 0 : i32
    %c0_i32_0 = arith.constant 0 : i32
    %c0_i32_1 = arith.constant 0 : i32
    return %c0_i32, %c0_i32_0 : i32, i32
  }
  func.func @transform_4(%arg0: i32) -> (i32, i32) {
    %c0_i32 = arith.constant 0 : i32
    %c0_i32_0 = arith.constant 0 : i32
    %c0_i32_1 = arith.constant 0 : i32
    return %c0_i32, %c0_i32_0 : i32, i32
  }
  func.func @transform_5(%arg0: i32) -> (i32, i32) {
    %c0_i32 = arith.constant 0 : i32
    %c0_i32_0 = arith.constant 0 : i32
    return %arg0, %c0_i32 : i32, i32
  }
}

</mosaic_0001>

<llo_original>
// kernel: tpu_custom_call.1
$region0: #{tpu_custom_call.1}
  #allocation0 [shape = 'u32[]', space=smem, size = 0x4, offset = 0x4, fixed_abs, tag = 'smem constant byte address 0x4 - core index']
  #allocation1 [shape = 'u32[72,128]{1,0:T(1,128)}', space=vmem, size = 0x9000, scoped, tag = 'internal scratch']
  %s0 = inlined_call_operand.hbm [shape: f32[16,32], index: 0, kind: input, shape index: {}]
  %s1 = inlined_call_operand.hbm [shape: bf16[32,128], index: 1, kind: input, shape index: {}]
  %s2 = inlined_call_operand.vmem [shape: f32[1,128], index: 2, kind: input, shape index: {}]
  %s3 = inlined_call_operand.hbm [shape: bf16[128,128], index: 3, kind: input, shape index: {}]
  %s4 = inlined_call_operand.vmem [shape: f32[1,128], index: 4, kind: input, shape index: {}]
  %s5 = inlined_call_operand.hbm [shape: bf16[16,128], index: 5, kind: output, shape index: {}]
  %s6 = sld [smem:[#allocation0]]
  $region65: #{tpu_custom_call.1} parent=0
    _
  %s8 = ssub.s32 1, %s6
  %s9 = scalar_select 0, %s8, %s6
  $region1: #{tpu_custom_call.1} parent=0
    #allocation2 [shape = 'u8[8192]{0}', space=vmem, size = 0x2000, scoped, tag = 'input window, operand 0']
    #allocation3 [shape = 's32[2]{0}', space=sflag, size = 0x8, scoped, tag = 'scoped memory for tpu_custom_call.1']
    #allocation4 [shape = 's32[2]{0}', space=sflag, size = 0x8, scoped, tag = 'scoped memory for tpu_custom_call.1']
    #allocation5 [shape = 'u8[8192]{0}', space=vmem, size = 0x2000, scoped, tag = 'input window, operand 1, single buffered']
    #allocation6 [shape = 's32[1]{0}', space=sflag, size = 0x4, scoped, tag = 'scoped memory for tpu_custom_call.1']
    #allocation7 [shape = 'u8[32768]{0}', space=vmem, size = 0x8000, scoped, tag = 'input window, operand 3, single buffered']
    #allocation8 [shape = 'u8[4096]{0}', space=vmem, size = 0x1000, scoped, tag = 'output window, operand 0']
    %10 = vsyncpa [#allocation3], 0
    %s11 = scalar_lea.sflag [#allocation3], 1
    %12 = vsyncpa %s11, 0
    %13 = vsyncpa [#allocation6], 0
    %14 = vsyncpa [#allocation4], 0
    %s15 = scalar_lea.sflag [#allocation4], 1
    %16 = vsyncpa %s15, 0
    loop: start=0, step=1, limit=4
    $region2: #{tpu_custom_call.1} parent=1 // loop_pre_header
      _
    $region3: #{tpu_custom_call.1} parent=1 // loop_header
      %s18 = sphi 0, %s22
      %p19 = scmp.ge.s32.totalorder %s18, 4
      %s28 = sphi 0, %s30
      %s31 = sphi 0, %s28
      %s32 = sphi 0, %s31
      %s48 = sphi 0, %s32
      %s52 = sphi 0, %s52
      %s54 = sphi 0, %s52
      %s55 = sphi 0, %s54
      %s69 = sphi 0, %s55
      %s73 = sphi 0, %s73
      %s75 = sphi 0, %s73
      %s76 = sphi 0, %s75
      %s90 = sphi 0, %s76
      %s94 = sphi 0, %s94
      %s96 = sphi 0, %s94
      %s97 = sphi 0, %s96
      %s111 = sphi 0, %s97
      %s115 = sphi 0, %s115
      %s117 = sphi 0, %s115
      %s118 = sphi 0, %s117
      %s132 = sphi 0, %s118
      %s138 = sphi 0, %s140
      %s141 = sphi 0, %s138
      %s142 = sphi 0, %s141
      %s158 = sphi 0, %s142
    $region4: #{tpu_custom_call.1} parent=1 // loop_header_branch
      %21 = sbr.rel (%p19) target = $region8
    $region5: #{tpu_custom_call.1} parent=1 // loop_body
      %s23 = ssub.s32 %s18, 1
      %s24 = ssub.s32 %s18, 2
      %s25 = sadd.s32 %s18, 1
      %s26 = ssub.s32 %s18, %s25
      %p27 = scmp.eq.s32.totalorder %s26, 0
      %s29 = sadd.s32 %s28, 1
      %s30 = scalar_select %p27, %s28, %s29
      %p33 = pneg %p27
      %p34 = scmp.eq.s32.totalorder %s18, 1
      %p35 = por %p33, %p34
      %p36 = scmp.ne.s32.totalorder %s28, %s31
      %p37 = scmp.eq.s32.totalorder %s18, 0
      %p38 = por %p36, %p37
      %p39 = scmp.ne.s32.totalorder %s28, %s31
      %p40 = scmp.eq.s32.totalorder %s23, 1
      %p41 = por %p39, %p40
      %p42 = scmp.ne.s32.totalorder %s31, %s32
      %p43 = scmp.eq.s32.totalorder %s23, 0
      %p44 = por %p42, %p43
      %p45 = scmp.ne.s32.totalorder %s31, %s32
      %p46 = scmp.eq.s32.totalorder %s24, 1
      %p47 = por %p45, %p46
      %p49 = scmp.ne.s32.totalorder %s32, %s48
      %p50 = scmp.eq.s32.totalorder %s24, 0
      %p51 = por %p49, %p50
      %s53 = sadd.s32 %s52, 1
      %p56 = scmp.eq.s32.totalorder %s18, 1
      %p57 = scmp.ne.s32.totalorder %s52, %s54
      %p58 = scmp.eq.s32.totalorder %s18, 0
      %p59 = por %p57, %p58
      %p60 = scmp.ne.s32.totalorder %s52, %s54
      %p61 = scmp.eq.s32.totalorder %s23, 1
      %p62 = por %p60, %p61
      %p63 = scmp.ne.s32.totalorder %s54, %s55
      %p64 = scmp.eq.s32.totalorder %s23, 0
      %p65 = por %p63, %p64
      %p66 = scmp.ne.s32.totalorder %s54, %s55
      %p67 = scmp.eq.s32.totalorder %s24, 1
      %p68 = por %p66, %p67
      %p70 = scmp.ne.s32.totalorder %s55, %s69
      %p71 = scmp.eq.s32.totalorder %s24, 0
      %p72 = por %p70, %p71
      %s74 = sadd.s32 %s73, 1
      %p77 = scmp.eq.s32.totalorder %s18, 1
      %p78 = scmp.ne.s32.totalorder %s73, %s75
      %p79 = scmp.eq.s32.totalorder %s18, 0
      %p80 = por %p78, %p79
      %p81 = scmp.ne.s32.totalorder %s73, %s75
      %p82 = scmp.eq.s32.totalorder %s23, 1
      %p83 = por %p81, %p82
      %p84 = scmp.ne.s32.totalorder %s75, %s76
      %p85 = scmp.eq.s32.totalorder %s23, 0
      %p86 = por %p84, %p85
      %p87 = scmp.ne.s32.totalorder %s75, %s76
      %p88 = scmp.eq.s32.totalorder %s24, 1
      %p89 = por %p87, %p88
      %p91 = scmp.ne.s32.totalorder %s76, %s90
      %p92 = scmp.eq.s32.totalorder %s24, 0
      %p93 = por %p91, %p92
      %s95 = sadd.s32 %s94, 1
      %p98 = scmp.eq.s32.totalorder %s18, 1
      %p99 = scmp.ne.s32.totalorder %s94, %s96
      %p100 = scmp.eq.s32.totalorder %s18, 0
      %p101 = por %p99, %p100
      %p102 = scmp.ne.s32.totalorder %s94, %s96
      %p103 = scmp.eq.s32.totalorder %s23, 1
      %p104 = por %p102, %p103
      %p105 = scmp.ne.s32.totalorder %s96, %s97
      %p106 = scmp.eq.s32.totalorder %s23, 0
      %p107 = por %p105, %p106
      %p108 = scmp.ne.s32.totalorder %s96, %s97
      %p109 = scmp.eq.s32.totalorder %s24, 1
      %p110 = por %p108, %p109
      %p112 = scmp.ne.s32.totalorder %s97, %s111
      %p113 = scmp.eq.s32.totalorder %s24, 0
      %p114 = por %p112, %p113
      %s116 = sadd.s32 %s115, 1
      %p119 = scmp.eq.s32.totalorder %s18, 1
      %p120 = scmp.ne.s32.totalorder %s115, %s117
      %p121 = scmp.eq.s32.totalorder %s18, 0
      %p122 = por %p120, %p121
      %p123 = scmp.ne.s32.totalorder %s115, %s117
      %p124 = scmp.eq.s32.totalorder %s23, 1
      %p125 = por %p123, %p124
      %p126 = scmp.ne.s32.totalorder %s117, %s118
      %p127 = scmp.eq.s32.totalorder %s23, 0
      %p128 = por %p126, %p127
      %p129 = scmp.ne.s32.totalorder %s117, %s118
      %p130 = scmp.eq.s32.totalorder %s24, 1
      %p131 = por %p129, %p130
      %p133 = scmp.ne.s32.totalorder %s118, %s132
      %p134 = scmp.eq.s32.totalorder %s24, 0
      %p135 = por %p133, %p134
      %s136 = ssub.s32 %s18, %s25
      %p137 = scmp.eq.s32.totalorder %s136, 0
      %s139 = sadd.s32 %s138, 1
      %s140 = scalar_select %p137, %s138, %s139
      %p143 = pneg %p137
      %p144 = scmp.eq.s32.totalorder %s18, 1
      %p145 = por %p143, %p144
      %p146 = scmp.ne.s32.totalorder %s138, %s141
      %p147 = scmp.eq.s32.totalorder %s18, 0
      %p148 = por %p146, %p147
      %p149 = scmp.ne.s32.totalorder %s138, %s141
      %p150 = scmp.eq.s32.totalorder %s23, 1
      %p151 = por %p149, %p150
      %p152 = scmp.ne.s32.totalorder %s141, %s142
      %p153 = scmp.eq.s32.totalorder %s23, 0
      %p154 = por %p152, %p153
      %p155 = scmp.ne.s32.totalorder %s141, %s142
      %p156 = scmp.eq.s32.totalorder %s24, 1
      %p157 = por %p155, %p156
      %p159 = scmp.ne.s32.totalorder %s142, %s158
      %p160 = scmp.eq.s32.totalorder %s24, 0
      %p161 = por %p159, %p160
      %p162 = scmp.le.s32.totalorder 1, %s18
      %p163 = scmp.lt.s32.totalorder %s18, 3
      %p164 = pnand %p162, %p163
      %p165 = pneg %p164
      // Predicated region
      $region9: #{tpu_custom_call.1} parent=5 // pred_check
        _
      $region10: #{tpu_custom_call.1} parent=5 // pred_check_branch
        %167 = sbr.rel (%p164) target = $region12
      $region11: #{tpu_custom_call.1} parent=5 // pred_region
        %s168 = ssub.s32 %s18, 1
        // Predicated region
        $region13: #{tpu_custom_call.1} parent=11 // pred_check
          %p169 = pneg %p65
        $region14: #{tpu_custom_call.1} parent=11 // pred_check_branch
          %171 = sbr.rel (%p169) target = $region16
        $region15: #{tpu_custom_call.1} parent=11 // pred_region
          %173 = vsyncadd [#allocation6], 0
          %s174 = sshll.u32 %s1, 4
          %s175 = int_to_ptr.hbm [resolvable:$true] %s174
          %s176 = sshll.u32 [#allocation5], 4
          %s177 = int_to_ptr.vmem [resolvable:$true] %s176
          %182 = dma.hbm_to_vmem [thread:$0]  %s175, 256, %s177, [#allocation6], 64, 64, 4
        $region16: #{tpu_custom_call.1} parent=11 // pred_fallthru
          _
        // Predicated region
        $region17: #{tpu_custom_call.1} parent=11 // pred_check
          %p183 = pneg %p86
        $region18: #{tpu_custom_call.1} parent=11 // pred_check_branch
          %185 = sbr.rel (%p183) target = $region20
        $region19: #{tpu_custom_call.1} parent=11 // pred_region
          _
        $region20: #{tpu_custom_call.1} parent=11 // pred_fallthru
          _
        // Predicated region
        $region21: #{tpu_custom_call.1} parent=11 // pred_check
          %p186 = pneg %p107
        $region22: #{tpu_custom_call.1} parent=11 // pred_check_branch
          %188 = sbr.rel (%p186) target = $region24
        $region23: #{tpu_custom_call.1} parent=11 // pred_region
          %190 = vsyncadd [#allocation6], 0
          %s191 = sshll.u32 %s3, 4
          %s192 = int_to_ptr.hbm [resolvable:$true] %s191
          %s193 = sshll.u32 [#allocation7], 4
          %s194 = int_to_ptr.vmem [resolvable:$true] %s193
          %199 = dma.hbm_to_vmem [thread:$0]  %s192, 1024, %s194, [#allocation6], 64, 64, 4
        $region24: #{tpu_custom_call.1} parent=11 // pred_fallthru
          _
        // Predicated region
        $region25: #{tpu_custom_call.1} parent=11 // pred_check
          %p200 = pneg %p128
        $region26: #{tpu_custom_call.1} parent=11 // pred_check_branch
          %202 = sbr.rel (%p200) target = $region28
        $region27: #{tpu_custom_call.1} parent=11 // pred_region
          _
        $region28: #{tpu_custom_call.1} parent=11 // pred_fallthru
          _
      $region12: #{tpu_custom_call.1} parent=5 // pred_fallthru
        _
      %p203 = scmp.lt.s32.totalorder %s18, 2
      // Predicated region
      $region29: #{tpu_custom_call.1} parent=5 // pred_check
        %p204 = pneg %p203
      $region30: #{tpu_custom_call.1} parent=5 // pred_check_branch
        %206 = sbr.rel (%p204) target = $region32
      $region31: #{tpu_custom_call.1} parent=5 // pred_region
        // Predicated region
        $region33: #{tpu_custom_call.1} parent=31 // pred_check
          %p207 = pneg %p38
        $region34: #{tpu_custom_call.1} parent=31 // pred_check_branch
          %209 = sbr.rel (%p207) target = $region36
        $region35: #{tpu_custom_call.1} parent=31 // pred_region
          %s210 = sand.u32 %s28, 1
          %s211 = scalar_lea.sflag [#allocation3], %s210
          %s212 = sand.u32 %s28, 1
          %s213 = smul.addr %s212, 8
          %s214 = scalar_lea.vmem [#allocation2], %s213
          %216 = vsyncadd %s211, 0
          %s217 = smul.addr %s18, 8
          %s218 = scalar_lea.hbm %s0, %s217
          %s220 = sshll.u32 %s218, 4
          %s221 = int_to_ptr.hbm [resolvable:$true] %s220
          %s222 = sshll.u32 %s214, 4
          %s223 = int_to_ptr.vmem [resolvable:$true] %s222
          %225 = dma.hbm_to_vmem [thread:$0]  %s221, 128, %s223, %s211
        $region36: #{tpu_custom_call.1} parent=31 // pred_fallthru
          _
      $region32: #{tpu_custom_call.1} parent=5 // pred_fallthru
        _
      %p226 = scmp.le.s32.totalorder 1, %s18
      %p227 = scmp.lt.s32.totalorder %s18, 3
      %p228 = pnand %p226, %p227
      %p229 = pneg %p228
      // Predicated region
      $region37: #{tpu_custom_call.1} parent=5 // pred_check
        _
      $region38: #{tpu_custom_call.1} parent=5 // pred_check_branch
        %231 = sbr.rel (%p228) target = $region40
      $region39: #{tpu_custom_call.1} parent=5 // pred_region
        %s232 = ssub.s32 %s18, 1
        %s233 = sand.u32 %s31, 1
        %s234 = scalar_lea.sflag [#allocation3], %s233
        %s235 = sand.u32 %s31, 1
        %s236 = smul.addr %s235, 8
        %s237 = scalar_lea.vmem [#allocation2], %s236
        // Predicated region
        $region41: #{tpu_custom_call.1} parent=39 // pred_check
          %p238 = pneg %p44
        $region42: #{tpu_custom_call.1} parent=39 // pred_check_branch
          %240 = sbr.rel (%p238) target = $region44
        $region43: #{tpu_custom_call.1} parent=39 // pred_region
          %242 = dma.done %s234, 128
        $region44: #{tpu_custom_call.1} parent=39 // pred_fallthru
          _
        // Predicated region
        $region45: #{tpu_custom_call.1} parent=39 // pred_check
          %p243 = pneg %p65
        $region46: #{tpu_custom_call.1} parent=39 // pred_check_branch
          %245 = sbr.rel (%p243) target = $region48
        $region47: #{tpu_custom_call.1} parent=39 // pred_region
          %247 = dma.done [#allocation6], 256
        $region48: #{tpu_custom_call.1} parent=39 // pred_fallthru
          _
        // Predicated region
        $region49: #{tpu_custom_call.1} parent=39 // pred_check
          %p248 = pneg %p107
        $region50: #{tpu_custom_call.1} parent=39 // pred_check_branch
          %250 = sbr.rel (%p248) target = $region52
        $region51: #{tpu_custom_call.1} parent=39 // pred_region
          %252 = dma.done [#allocation6], 1024
        $region52: #{tpu_custom_call.1} parent=39 // pred_fallthru
          _
        %s253 = sand.u32 %s31, 1
        %s254 = scalar_lea.sflag [#allocation3], %s253
        %s255 = sand.u32 %s31, 1
        %s256 = smul.addr %s255, 8
        %s257 = scalar_lea.vmem [#allocation2], %s256
        %p258 = pneg %p44
        %p259 = pneg %p41
        %p260 = pneg %p65
        %p261 = pneg %p62
        %p262 = pneg %p86
        %p263 = pneg %p83
        %p264 = pneg %p107
        %p265 = pneg %p104
        %p266 = pneg %p128
        %p267 = pneg %p125
        %p268 = pneg %p154
        %p269 = pneg %p151
        %s270 = sand.u32 %s141, 1
        %s271 = scalar_lea.sflag [#allocation4], %s270
        %s272 = sand.u32 %s141, 1
        %s273 = smul.addr %s272, 4
        %s274 = scalar_lea.vmem [#allocation8], %s273
        %v276 = vld [vmem:[%s237] sm:$0xff]
        %v277 = vpack.c.bf16 %v276, %v276
        %v278 = vld [vmem:[#allocation5] sm:$0xf]
        %v279 = vld [vmem:[#allocation5 + $0x4] sm:$0xf]
        %v280 = vld [vmem:[#allocation5 + $0x8] sm:$0xf]
        %v281 = vld [vmem:[#allocation5 + $0xc] sm:$0xf]
        %v282 = vld [vmem:[%s2] sm:$0x1]
        %v284 = vperm.slane %v282, 0
        %v290 = vunpack.c.l.b16 %v278
        %v291 = vunpack.c.l.b16 %v279
        %v292 = vunpack.c.l.b16 %v280
        %v293 = vunpack.c.l.b16 %v281
        %v294 = vpack.c.b16 %v291, %v290
        %v295 = vpack.c.b16 %v293, %v292
        %vm298 = vcmask 261120
        %v300 = vsel %vm298, %v277, 0
        %302 = vmatpush.bf16.msra.mxu0 0
        %303 = vmatpush.bf16.msra.mxu0 0
        %304 = vmatpush.bf16.msra.mxu0 0
        %305 = vmatpush.bf16.msra.mxu0 0
        %306 = vmatpush.bf16.msra.mxu0 0
        %307 = vmatpush.bf16.msra.mxu0 0
        %308 = vmatpush.bf16.msra.mxu0 %v295
        %309 = vmatpush.bf16.msra.mxu0 %v294
        %310 = vmatmul.bf16.gmra.mxu0 %v300
        %v311 = vpop.f32.mrf.mxu0
        %v312 = vadd.f32 %v284, %v311
        %v313 = vpop.f32.mrf.mxu0
        %314 = vdwg.mxu0
        %v315 = vmax.f32 %v312, 0.0
        %v316 = vpack.c.bf16 %v315, %v315
        %v317 = vld [vmem:[#allocation7] sm:$0xf]
        %v318 = vld [vmem:[#allocation7 + $0x4] sm:$0xf]
        %v319 = vld [vmem:[#allocation7 + $0x8] sm:$0xf]
        %v320 = vld [vmem:[#allocation7 + $0xc] sm:$0xf]
        %v321 = vld [vmem:[#allocation7 + $0x10] sm:$0xf]
        %v322 = vld [vmem:[#allocation7 + $0x14] sm:$0xf]
        %v323 = vld [vmem:[#allocation7 + $0x18] sm:$0xf]
        %v324 = vld [vmem:[#allocation7 + $0x1c] sm:$0xf]
        %v325 = vld [vmem:[#allocation7 + $0x20] sm:$0xf]
        %v326 = vld [vmem:[#allocation7 + $0x24] sm:$0xf]
        %v327 = vld [vmem:[#allocation7 + $0x28] sm:$0xf]
        %v328 = vld [vmem:[#allocation7 + $0x2c] sm:$0xf]
        %v329 = vld [vmem:[#allocation7 + $0x30] sm:$0xf]
        %v330 = vld [vmem:[#allocation7 + $0x34] sm:$0xf]
        %v331 = vld [vmem:[#allocation7 + $0x38] sm:$0xf]
        %v332 = vld [vmem:[#allocation7 + $0x3c] sm:$0xf]
        %v333 = vld [vmem:[%s4] sm:$0x1]
        %v335 = vperm.slane %v333, 0
        %v353 = vunpack.c.l.b16 %v317
        %v354 = vunpack.c.l.b16 %v318
        %v355 = vunpack.c.l.b16 %v319
        %v356 = vunpack.c.l.b16 %v320
        %v357 = vunpack.c.l.b16 %v321
        %v358 = vunpack.c.l.b16 %v322
        %v359 = vunpack.c.l.b16 %v323
        %v360 = vunpack.c.l.b16 %v324
        %v361 = vunpack.c.l.b16 %v325
        %v362 = vunpack.c.l.b16 %v326
        %v363 = vunpack.c.l.b16 %v327
        %v364 = vunpack.c.l.b16 %v328
        %v365 = vunpack.c.l.b16 %v329
        %v366 = vunpack.c.l.b16 %v330
        %v367 = vunpack.c.l.b16 %v331
        %v368 = vunpack.c.l.b16 %v332
        %v369 = vpack.c.b16 %v354, %v353
        %v370 = vpack.c.b16 %v356, %v355
        %v371 = vpack.c.b16 %v358, %v357
        %v372 = vpack.c.b16 %v360, %v359
        %v373 = vpack.c.b16 %v362, %v361
        %v374 = vpack.c.b16 %v364, %v363
        %v375 = vpack.c.b16 %v366, %v365
        %v376 = vpack.c.b16 %v368, %v367
        %385 = vmatpush.bf16.msra.mxu0 %v376
        %386 = vmatpush.bf16.msra.mxu0 %v375
        %387 = vmatpush.bf16.msra.mxu0 %v374
        %388 = vmatpush.bf16.msra.mxu0 %v373
        %389 = vmatpush.bf16.msra.mxu0 %v372
        %390 = vmatpush.bf16.msra.mxu0 %v371
        %391 = vmatpush.bf16.msra.mxu0 %v370
        %392 = vmatpush.bf16.msra.mxu0 %v369
        %393 = vmatmul.bf16.gmra.mxu0 %v316
        %v394 = vpop.f32.mrf.mxu0
        %v395 = vadd.f32 %v335, %v394
        %v396 = vpop.f32.mrf.mxu0
        %397 = vdwg.mxu0
        %v398 = vpack.c.bf16 %v395, %v395
        %399 = vst [vmem:[%s274] sm:$0xf] %v398
        %s400 = sand.u32 %s141, 1
        %s401 = scalar_lea.sflag [#allocation4], %s400
        %s402 = sand.u32 %s141, 1
        %s403 = smul.addr %s402, 4
        %s404 = scalar_lea.vmem [#allocation8], %s403
        // Predicated region
        $region53: #{tpu_custom_call.1} parent=39 // pred_check
          %p405 = pneg %p151
        $region54: #{tpu_custom_call.1} parent=39 // pred_check_branch
          %407 = sbr.rel (%p405) target = $region56
        $region55: #{tpu_custom_call.1} parent=39 // pred_region
          %409 = vsyncadd %s401, 0
          %s410 = smul.addr %s23, 4
          %s411 = scalar_lea.hbm %s5, %s410
          %s413 = sshll.u32 %s404, 4
          %s414 = int_to_ptr.vmem [resolvable:$true] %s413
          %s415 = sshll.u32 %s411, 4
          %s416 = int_to_ptr.hbm [resolvable:$true] %s415
          %418 = dma.vmem_to_hbm [thread:$0]  %s414, 64, %s416, %s401
        $region56: #{tpu_custom_call.1} parent=39 // pred_fallthru
          _
      $region40: #{tpu_custom_call.1} parent=5 // pred_fallthru
        _
      %p419 = scmp.le.s32.totalorder 2, %s18
      // Predicated region
      $region57: #{tpu_custom_call.1} parent=5 // pred_check
        %p420 = pneg %p419
      $region58: #{tpu_custom_call.1} parent=5 // pred_check_branch
        %422 = sbr.rel (%p420) target = $region60
      $region59: #{tpu_custom_call.1} parent=5 // pred_region
        %s423 = ssub.s32 %s18, 2
        // Predicated region
        $region61: #{tpu_custom_call.1} parent=59 // pred_check
          %p424 = pneg %p157
        $region62: #{tpu_custom_call.1} parent=59 // pred_check_branch
          %426 = sbr.rel (%p424) target = $region64
        $region63: #{tpu_custom_call.1} parent=59 // pred_region
          %s427 = sand.u32 %s142, 1
          %s428 = scalar_lea.sflag [#allocation4], %s427
          %s429 = sand.u32 %s142, 1
          %s430 = smul.addr %s429, 4
          %s431 = scalar_lea.vmem [#allocation8], %s430
          %433 = dma.done %s428, 64
        $region64: #{tpu_custom_call.1} parent=59 // pred_fallthru
          _
      $region60: #{tpu_custom_call.1} parent=5 // pred_fallthru
        _
    $region6: #{tpu_custom_call.1} parent=1 // loop_footer
      %s22 = sadd.s32 1, %s18
    $region7: #{tpu_custom_call.1} parent=1 // loop_footer_branch
      %17 = sbr.rel target = $region3
    $region8: #{tpu_custom_call.1} parent=1 // loop_exit
      _
    %434 = vsyncpa [#allocation3], 1
    %s435 = scalar_lea.sflag [#allocation3], 1
    %436 = vsyncpa %s435, 1
    %437 = vsyncpa [#allocation6], 1
    %438 = vsyncpa [#allocation4], 1
    %s439 = scalar_lea.sflag [#allocation4], 1
    %440 = vsyncpa %s439, 1

// kernel: tpu_custom_call.1
$region0: #{tpu_custom_call.1}
  #allocation0 [shape = 'u32[]', space=smem, size = 0x4, offset = 0x4, fixed_abs, tag = 'smem constant byte address 0x4 - core index']
  #allocation1 [shape = 'u32[72,128]{1,0:T(1,128)}', space=vmem, size = 0x9000, scoped, tag = 'internal scratch']
  %s0 = inlined_call_operand.hbm [shape: f32[16,32], index: 0, kind: input, shape index: {}]
  %s1 = inlined_call_operand.hbm [shape: bf16[32,128], index: 1, kind: input, shape index: {}]
  %s2 = inlined_call_operand.vmem [shape: f32[1,128], index: 2, kind: input, shape index: {}]
  %s3 = inlined_call_operand.hbm [shape: bf16[128,128], index: 3, kind: input, shape index: {}]
  %s4 = inlined_call_operand.vmem [shape: f32[1,128], index: 4, kind: input, shape index: {}]
  %s5 = inlined_call_operand.hbm [shape: bf16[16,128], index: 5, kind: output, shape index: {}]
  %s6 = sld [smem:[#allocation0]]
  $region65: #{tpu_custom_call.1} parent=0
    _
  %s8 = ssub.s32 1, %s6
  %s9 = scalar_select 0, %s8, %s6
  $region1: #{tpu_custom_call.1} parent=0
    #allocation2 [shape = 'u8[8192]{0}', space=vmem, size = 0x2000, scoped, tag = 'input window, operand 0']
    #allocation3 [shape = 's32[2]{0}', space=sflag, size = 0x8, scoped, tag = 'scoped memory for tpu_custom_call.1']
    #allocation4 [shape = 's32[2]{0}', space=sflag, size = 0x8, scoped, tag = 'scoped memory for tpu_custom_call.1']
    #allocation5 [shape = 'u8[8192]{0}', space=vmem, size = 0x2000, scoped, tag = 'input window, operand 1, single buffered']
    #allocation6 [shape = 's32[1]{0}', space=sflag, size = 0x4, scoped, tag = 'scoped memory for tpu_custom_call.1']
    #allocation7 [shape = 'u8[32768]{0}', space=vmem, size = 0x8000, scoped, tag = 'input window, operand 3, single buffered']
    #allocation8 [shape = 'u8[4096]{0}', space=vmem, size = 0x1000, scoped, tag = 'output window, operand 0']
    %10 = vsyncpa [#allocation3], 0
    %s11 = scalar_lea.sflag [#allocation3], 1
    %12 = vsyncpa %s11, 0
    %13 = vsyncpa [#allocation6], 0
    %14 = vsyncpa [#allocation4], 0
    %s15 = scalar_lea.sflag [#allocation4], 1
    %16 = vsyncpa %s15, 0
    loop: start=0, step=1, limit=4
    $region2: #{tpu_custom_call.1} parent=1 // loop_pre_header
      _
    $region3: #{tpu_custom_call.1} parent=1 // loop_header
      %s18 = sphi 0, %s22
      %p19 = scmp.ge.s32.totalorder %s18, 4
      %s28 = sphi 0, %s30
      %s31 = sphi 0, %s28
      %s32 = sphi 0, %s31
      %s48 = sphi 0, %s32
      %s52 = sphi 0, %s52
      %s54 = sphi 0, %s52
      %s55 = sphi 0, %s54
      %s69 = sphi 0, %s55
      %s73 = sphi 0, %s73
      %s75 = sphi 0, %s73
      %s76 = sphi 0, %s75
      %s90 = sphi 0, %s76
      %s94 = sphi 0, %s94
      %s96 = sphi 0, %s94
      %s97 = sphi 0, %s96
      %s111 = sphi 0, %s97
      %s115 = sphi 0, %s115
      %s117 = sphi 0, %s115
      %s118 = sphi 0, %s117
      %s132 = sphi 0, %s118
      %s138 = sphi 0, %s140
      %s141 = sphi 0, %s138
      %s142 = sphi 0, %s141
      %s158 = sphi 0, %s142
    $region4: #{tpu_custom_call.1} parent=1 // loop_header_branch
      %21 = sbr.rel (%p19) target = $region8
    $region5: #{tpu_custom_call.1} parent=1 // loop_body
      %s23 = ssub.s32 %s18, 1
      %s24 = ssub.s32 %s18, 2
      %s25 = sadd.s32 %s18, 1
      %s26 = ssub.s32 %s18, %s25
      %p27 = scmp.eq.s32.totalorder %s26, 0
      %s29 = sadd.s32 %s28, 1
      %s30 = scalar_select %p27, %s28, %s29
      %p33 = pneg %p27
      %p34 = scmp.eq.s32.totalorder %s18, 1
      %p35 = por %p33, %p34
      %p36 = scmp.ne.s32.totalorder %s28, %s31
      %p37 = scmp.eq.s32.totalorder %s18, 0
      %p38 = por %p36, %p37
      %p39 = scmp.ne.s32.totalorder %s28, %s31
      %p40 = scmp.eq.s32.totalorder %s23, 1
      %p41 = por %p39, %p40
      %p42 = scmp.ne.s32.totalorder %s31, %s32
      %p43 = scmp.eq.s32.totalorder %s23, 0
      %p44 = por %p42, %p43
      %p45 = scmp.ne.s32.totalorder %s31, %s32
      %p46 = scmp.eq.s32.totalorder %s24, 1
      %p47 = por %p45, %p46
      %p49 = scmp.ne.s32.totalorder %s32, %s48
      %p50 = scmp.eq.s32.totalorder %s24, 0
      %p51 = por %p49, %p50
      %s53 = sadd.s32 %s52, 1
      %p56 = scmp.eq.s32.totalorder %s18, 1
      %p57 = scmp.ne.s32.totalorder %s52, %s54
      %p58 = scmp.eq.s32.totalorder %s18, 0
      %p59 = por %p57, %p58
      %p60 = scmp.ne.s32.totalorder %s52, %s54
      %p61 = scmp.eq.s32.totalorder %s23, 1
      %p62 = por %p60, %p61
      %p63 = scmp.ne.s32.totalorder %s54, %s55
      %p64 = scmp.eq.s32.totalorder %s23, 0
      %p65 = por %p63, %p64
      %p66 = scmp.ne.s32.totalorder %s54, %s55
      %p67 = scmp.eq.s32.totalorder %s24, 1
      %p68 = por %p66, %p67
      %p70 = scmp.ne.s32.totalorder %s55, %s69
      %p71 = scmp.eq.s32.totalorder %s24, 0
      %p72 = por %p70, %p71
      %s74 = sadd.s32 %s73, 1
      %p77 = scmp.eq.s32.totalorder %s18, 1
      %p78 = scmp.ne.s32.totalorder %s73, %s75
      %p79 = scmp.eq.s32.totalorder %s18, 0
      %p80 = por %p78, %p79
      %p81 = scmp.ne.s32.totalorder %s73, %s75
      %p82 = scmp.eq.s32.totalorder %s23, 1
      %p83 = por %p81, %p82
      %p84 = scmp.ne.s32.totalorder %s75, %s76
      %p85 = scmp.eq.s32.totalorder %s23, 0
      %p86 = por %p84, %p85
      %p87 = scmp.ne.s32.totalorder %s75, %s76
      %p88 = scmp.eq.s32.totalorder %s24, 1
      %p89 = por %p87, %p88
      %p91 = scmp.ne.s32.totalorder %s76, %s90
      %p92 = scmp.eq.s32.totalorder %s24, 0
      %p93 = por %p91, %p92
      %s95 = sadd.s32 %s94, 1
      %p98 = scmp.eq.s32.totalorder %s18, 1
      %p99 = scmp.ne.s32.totalorder %s94, %s96
      %p100 = scmp.eq.s32.totalorder %s18, 0
      %p101 = por %p99, %p100
      %p102 = scmp.ne.s32.totalorder %s94, %s96
      %p103 = scmp.eq.s32.totalorder %s23, 1
      %p104 = por %p102, %p103
      %p105 = scmp.ne.s32.totalorder %s96, %s97
      %p106 = scmp.eq.s32.totalorder %s23, 0
      %p107 = por %p105, %p106
      %p108 = scmp.ne.s32.totalorder %s96, %s97
      %p109 = scmp.eq.s32.totalorder %s24, 1
      %p110 = por %p108, %p109
      %p112 = scmp.ne.s32.totalorder %s97, %s111
      %p113 = scmp.eq.s32.totalorder %s24, 0
      %p114 = por %p112, %p113
      %s116 = sadd.s32 %s115, 1
      %p119 = scmp.eq.s32.totalorder %s18, 1
      %p120 = scmp.ne.s32.totalorder %s115, %s117
      %p121 = scmp.eq.s32.totalorder %s18, 0
      %p122 = por %p120, %p121
      %p123 = scmp.ne.s32.totalorder %s115, %s117
      %p124 = scmp.eq.s32.totalorder %s23, 1
      %p125 = por %p123, %p124
      %p126 = scmp.ne.s32.totalorder %s117, %s118
      %p127 = scmp.eq.s32.totalorder %s23, 0
      %p128 = por %p126, %p127
      %p129 = scmp.ne.s32.totalorder %s117, %s118
      %p130 = scmp.eq.s32.totalorder %s24, 1
      %p131 = por %p129, %p130
      %p133 = scmp.ne.s32.totalorder %s118, %s132
      %p134 = scmp.eq.s32.totalorder %s24, 0
      %p135 = por %p133, %p134
      %s136 = ssub.s32 %s18, %s25
      %p137 = scmp.eq.s32.totalorder %s136, 0
      %s139 = sadd.s32 %s138, 1
      %s140 = scalar_select %p137, %s138, %s139
      %p143 = pneg %p137
      %p144 = scmp.eq.s32.totalorder %s18, 1
      %p145 = por %p143, %p144
      %p146 = scmp.ne.s32.totalorder %s138, %s141
      %p147 = scmp.eq.s32.totalorder %s18, 0
      %p148 = por %p146, %p147
      %p149 = scmp.ne.s32.totalorder %s138, %s141
      %p150 = scmp.eq.s32.totalorder %s23, 1
      %p151 = por %p149, %p150
      %p152 = scmp.ne.s32.totalorder %s141, %s142
      %p153 = scmp.eq.s32.totalorder %s23, 0
      %p154 = por %p152, %p153
      %p155 = scmp.ne.s32.totalorder %s141, %s142
      %p156 = scmp.eq.s32.totalorder %s24, 1
      %p157 = por %p155, %p156
      %p159 = scmp.ne.s32.totalorder %s142, %s158
      %p160 = scmp.eq.s32.totalorder %s24, 0
      %p161 = por %p159, %p160
      %p162 = scmp.le.s32.totalorder 1, %s18
      %p163 = scmp.lt.s32.totalorder %s18, 3
      %p164 = pnand %p162, %p163
      %p165 = pneg %p164
      // Predicated region
      $region9: #{tpu_custom_call.1} parent=5 // pred_check
        _
      $region10: #{tpu_custom_call.1} parent=5 // pred_check_branch
        %167 = sbr.rel (%p164) target = $region12
      $region11: #{tpu_custom_call.1} parent=5 // pred_region
        %s168 = ssub.s32 %s18, 1
        // Predicated region
        $region13: #{tpu_custom_call.1} parent=11 // pred_check
          %p169 = pneg %p65
        $region14: #{tpu_custom_call.1} parent=11 // pred_check_branch
          %171 = sbr.rel (%p169) target = $region16
        $region15: #{tpu_custom_call.1} parent=11 // pred_region
          %173 = vsyncadd [#allocation6], 0
          %s174 = sshll.u32 %s1, 4
          %s175 = int_to_ptr.hbm [resolvable:$true] %s174
          %s176 = sshll.u32 [#allocation5], 4
          %s177 = int_to_ptr.vmem [resolvable:$true] %s176
          %182 = dma.hbm_to_vmem [thread:$0]  %s175, 256, %s177, [#allocation6], 64, 64, 4
        $region16: #{tpu_custom_call.1} parent=11 // pred_fallthru
          _
        // Predicated region
        $region17: #{tpu_custom_call.1} parent=11 // pred_check
          %p183 = pneg %p86
        $region18: #{tpu_custom_call.1} parent=11 // pred_check_branch
          %185 = sbr.rel (%p183) target = $region20
        $region19: #{tpu_custom_call.1} parent=11 // pred_region
          _
        $region20: #{tpu_custom_call.1} parent=11 // pred_fallthru
          _
        // Predicated region
        $region21: #{tpu_custom_call.1} parent=11 // pred_check
          %p186 = pneg %p107
        $region22: #{tpu_custom_call.1} parent=11 // pred_check_branch
          %188 = sbr.rel (%p186) target = $region24
        $region23: #{tpu_custom_call.1} parent=11 // pred_region
          %190 = vsyncadd [#allocation6], 0
          %s191 = sshll.u32 %s3, 4
          %s192 = int_to_ptr.hbm [resolvable:$true] %s191
          %s193 = sshll.u32 [#allocation7], 4
          %s194 = int_to_ptr.vmem [resolvable:$true] %s193
          %199 = dma.hbm_to_vmem [thread:$0]  %s192, 1024, %s194, [#allocation6], 64, 64, 4
        $region24: #{tpu_custom_call.1} parent=11 // pred_fallthru
          _
        // Predicated region
        $region25: #{tpu_custom_call.1} parent=11 // pred_check
          %p200 = pneg %p128
        $region26: #{tpu_custom_call.1} parent=11 // pred_check_branch
          %202 = sbr.rel (%p200) target = $region28
        $region27: #{tpu_custom_call.1} parent=11 // pred_region
          _
        $region28: #{tpu_custom_call.1} parent=11 // pred_fallthru
          _
      $region12: #{tpu_custom_call.1} parent=5 // pred_fallthru
        _
      %p203 = scmp.lt.s32.totalorder %s18, 2
      // Predicated region
      $region29: #{tpu_custom_call.1} parent=5 // pred_check
        %p204 = pneg %p203
      $region30: #{tpu_custom_call.1} parent=5 // pred_check_branch
        %206 = sbr.rel (%p204) target = $region32
      $region31: #{tpu_custom_call.1} parent=5 // pred_region
        // Predicated region
        $region33: #{tpu_custom_call.1} parent=31 // pred_check
          %p207 = pneg %p38
        $region34: #{tpu_custom_call.1} parent=31 // pred_check_branch
          %209 = sbr.rel (%p207) target = $region36
        $region35: #{tpu_custom_call.1} parent=31 // pred_region
          %s210 = sand.u32 %s28, 1
          %s211 = scalar_lea.sflag [#allocation3], %s210
          %s212 = sand.u32 %s28, 1
          %s213 = smul.addr %s212, 8
          %s214 = scalar_lea.vmem [#allocation2], %s213
          %216 = vsyncadd %s211, 0
          %s217 = smul.addr %s18, 8
          %s218 = scalar_lea.hbm %s0, %s217
          %s220 = sshll.u32 %s218, 4
          %s221 = int_to_ptr.hbm [resolvable:$true] %s220
          %s222 = sshll.u32 %s214, 4
          %s223 = int_to_ptr.vmem [resolvable:$true] %s222
          %225 = dma.hbm_to_vmem [thread:$0]  %s221, 128, %s223, %s211
        $region36: #{tpu_custom_call.1} parent=31 // pred_fallthru
          _
      $region32: #{tpu_custom_call.1} parent=5 // pred_fallthru
        _
      %p226 = scmp.le.s32.totalorder 1, %s18
      %p227 = scmp.lt.s32.totalorder %s18, 3
      %p228 = pnand %p226, %p227
      %p229 = pneg %p228
      // Predicated region
      $region37: #{tpu_custom_call.1} parent=5 // pred_check
        _
      $region38: #{tpu_custom_call.1} parent=5 // pred_check_branch
        %231 = sbr.rel (%p228) target = $region40
      $region39: #{tpu_custom_call.1} parent=5 // pred_region
        %s232 = ssub.s32 %s18, 1
        %s233 = sand.u32 %s31, 1
        %s234 = scalar_lea.sflag [#allocation3], %s233
        %s235 = sand.u32 %s31, 1
        %s236 = smul.addr %s235, 8
        %s237 = scalar_lea.vmem [#allocation2], %s236
        // Predicated region
        $region41: #{tpu_custom_call.1} parent=39 // pred_check
          %p238 = pneg %p44
        $region42: #{tpu_custom_call.1} parent=39 // pred_check_branch
          %240 = sbr.rel (%p238) target = $region44
        $region43: #{tpu_custom_call.1} parent=39 // pred_region
          %242 = dma.done %s234, 128
        $region44: #{tpu_custom_call.1} parent=39 // pred_fallthru
          _
        // Predicated region
        $region45: #{tpu_custom_call.1} parent=39 // pred_check
          %p243 = pneg %p65
        $region46: #{tpu_custom_call.1} parent=39 // pred_check_branch
          %245 = sbr.rel (%p243) target = $region48
        $region47: #{tpu_custom_call.1} parent=39 // pred_region
          %247 = dma.done [#allocation6], 256
        $region48: #{tpu_custom_call.1} parent=39 // pred_fallthru
          _
        // Predicated region
        $region49: #{tpu_custom_call.1} parent=39 // pred_check
          %p248 = pneg %p107
        $region50: #{tpu_custom_call.1} parent=39 // pred_check_branch
          %250 = sbr.rel (%p248) target = $region52
        $region51: #{tpu_custom_call.1} parent=39 // pred_region
          %252 = dma.done [#allocation6], 1024
        $region52: #{tpu_custom_call.1} parent=39 // pred_fallthru
          _
        %s253 = sand.u32 %s31, 1
        %s254 = scalar_lea.sflag [#allocation3], %s253
        %s255 = sand.u32 %s31, 1
        %s256 = smul.addr %s255, 8
        %s257 = scalar_lea.vmem [#allocation2], %s256
        %p258 = pneg %p44
        %p259 = pneg %p41
        %p260 = pneg %p65
        %p261 = pneg %p62
        %p262 = pneg %p86
        %p263 = pneg %p83
        %p264 = pneg %p107
        %p265 = pneg %p104
        %p266 = pneg %p128
        %p267 = pneg %p125
        %p268 = pneg %p154
        %p269 = pneg %p151
        %s270 = sand.u32 %s141, 1
        %s271 = scalar_lea.sflag [#allocation4], %s270
        %s272 = sand.u32 %s141, 1
        %s273 = smul.addr %s272, 4
        %s274 = scalar_lea.vmem [#allocation8], %s273
        %v276 = vld [vmem:[%s237] sm:$0xff]
        %v277 = vpack.c.bf16 %v276, %v276
        %v278 = vld [vmem:[#allocation5] sm:$0xf]
        %v279 = vld [vmem:[#allocation5 + $0x4] sm:$0xf]
        %v280 = vld [vmem:[#allocation5 + $0x8] sm:$0xf]
        %v281 = vld [vmem:[#allocation5 + $0xc] sm:$0xf]
        %v282 = vld [vmem:[%s2] sm:$0x1]
        %v284 = vperm.slane %v282, 0
        %v290 = vunpack.c.l.b16 %v278
        %v291 = vunpack.c.l.b16 %v279
        %v292 = vunpack.c.l.b16 %v280
        %v293 = vunpack.c.l.b16 %v281
        %v294 = vpack.c.b16 %v291, %v290
        %v295 = vpack.c.b16 %v293, %v292
        %vm298 = vcmask 261120
        %v300 = vsel %vm298, %v277, 0
        %302 = vmatpush.bf16.msra.mxu0 0
        %303 = vmatpush.bf16.msra.mxu0 0
        %304 = vmatpush.bf16.msra.mxu0 0
        %305 = vmatpush.bf16.msra.mxu0 0
        %306 = vmatpush.bf16.msra.mxu0 0
        %307 = vmatpush.bf16.msra.mxu0 0
        %308 = vmatpush.bf16.msra.mxu0 %v295
        %309 = vmatpush.bf16.msra.mxu0 %v294
        %310 = vmatmul.bf16.gmra.mxu0 %v300
        %v311 = vpop.f32.mrf.mxu0
        %v312 = vadd.f32 %v284, %v311
        %v313 = vpop.f32.mrf.mxu0
        %314 = vdwg.mxu0
        %v315 = vmax.f32 %v312, 0.0
        %v316 = vpack.c.bf16 %v315, %v315
        %v317 = vld [vmem:[#allocation7] sm:$0xf]
        %v318 = vld [vmem:[#allocation7 + $0x4] sm:$0xf]
        %v319 = vld [vmem:[#allocation7 + $0x8] sm:$0xf]
        %v320 = vld [vmem:[#allocation7 + $0xc] sm:$0xf]
        %v321 = vld [vmem:[#allocation7 + $0x10] sm:$0xf]
        %v322 = vld [vmem:[#allocation7 + $0x14] sm:$0xf]
        %v323 = vld [vmem:[#allocation7 + $0x18] sm:$0xf]
        %v324 = vld [vmem:[#allocation7 + $0x1c] sm:$0xf]
        %v325 = vld [vmem:[#allocation7 + $0x20] sm:$0xf]
        %v326 = vld [vmem:[#allocation7 + $0x24] sm:$0xf]
        %v327 = vld [vmem:[#allocation7 + $0x28] sm:$0xf]
        %v328 = vld [vmem:[#allocation7 + $0x2c] sm:$0xf]
        %v329 = vld [vmem:[#allocation7 + $0x30] sm:$0xf]
        %v330 = vld [vmem:[#allocation7 + $0x34] sm:$0xf]
        %v331 = vld [vmem:[#allocation7 + $0x38] sm:$0xf]
        %v332 = vld [vmem:[#allocation7 + $0x3c] sm:$0xf]
        %v333 = vld [vmem:[%s4] sm:$0x1]
        %v335 = vperm.slane %v333, 0
        %v353 = vunpack.c.l.b16 %v317
        %v354 = vunpack.c.l.b16 %v318
        %v355 = vunpack.c.l.b16 %v319
        %v356 = vunpack.c.l.b16 %v320
        %v357 = vunpack.c.l.b16 %v321
        %v358 = vunpack.c.l.b16 %v322
        %v359 = vunpack.c.l.b16 %v323
        %v360 = vunpack.c.l.b16 %v324
        %v361 = vunpack.c.l.b16 %v325
        %v362 = vunpack.c.l.b16 %v326
        %v363 = vunpack.c.l.b16 %v327
        %v364 = vunpack.c.l.b16 %v328
        %v365 = vunpack.c.l.b16 %v329
        %v366 = vunpack.c.l.b16 %v330
        %v367 = vunpack.c.l.b16 %v331
        %v368 = vunpack.c.l.b16 %v332
        %v369 = vpack.c.b16 %v354, %v353
        %v370 = vpack.c.b16 %v356, %v355
        %v371 = vpack.c.b16 %v358, %v357
        %v372 = vpack.c.b16 %v360, %v359
        %v373 = vpack.c.b16 %v362, %v361
        %v374 = vpack.c.b16 %v364, %v363
        %v375 = vpack.c.b16 %v366, %v365
        %v376 = vpack.c.b16 %v368, %v367
        %385 = vmatpush.bf16.msra.mxu0 %v376
        %386 = vmatpush.bf16.msra.mxu0 %v375
        %387 = vmatpush.bf16.msra.mxu0 %v374
        %388 = vmatpush.bf16.msra.mxu0 %v373
        %389 = vmatpush.bf16.msra.mxu0 %v372
        %390 = vmatpush.bf16.msra.mxu0 %v371
        %391 = vmatpush.bf16.msra.mxu0 %v370
        %392 = vmatpush.bf16.msra.mxu0 %v369
        %393 = vmatmul.bf16.gmra.mxu0 %v316
        %v394 = vpop.f32.mrf.mxu0
        %v395 = vadd.f32 %v335, %v394
        %v396 = vpop.f32.mrf.mxu0
        %397 = vdwg.mxu0
        %v398 = vpack.c.bf16 %v395, %v395
        %399 = vst [vmem:[%s274] sm:$0xf] %v398
        %s400 = sand.u32 %s141, 1
        %s401 = scalar_lea.sflag [#allocation4], %s400
        %s402 = sand.u32 %s141, 1
        %s403 = smul.addr %s402, 4
        %s404 = scalar_lea.vmem [#allocation8], %s403
        // Predicated region
        $region53: #{tpu_custom_call.1} parent=39 // pred_check
          %p405 = pneg %p151
        $region54: #{tpu_custom_call.1} parent=39 // pred_check_branch
          %407 = sbr.rel (%p405) target = $region56
        $region55: #{tpu_custom_call.1} parent=39 // pred_region
          %409 = vsyncadd %s401, 0
          %s410 = smul.addr %s23, 4
          %s411 = scalar_lea.hbm %s5, %s410
          %s413 = sshll.u32 %s404, 4
          %s414 = int_to_ptr.vmem [resolvable:$true] %s413
          %s415 = sshll.u32 %s411, 4
          %s416 = int_to_ptr.hbm [resolvable:$true] %s415
          %418 = dma.vmem_to_hbm [thread:$0]  %s414, 64, %s416, %s401
        $region56: #{tpu_custom_call.1} parent=39 // pred_fallthru
          _
      $region40: #{tpu_custom_call.1} parent=5 // pred_fallthru
        _
      %p419 = scmp.le.s32.totalorder 2, %s18
      // Predicated region
      $region57: #{tpu_custom_call.1} parent=5 // pred_check
        %p420 = pneg %p419
      $region58: #{tpu_custom_call.1} parent=5 // pred_check_branch
        %422 = sbr.rel (%p420) target = $region60
      $region59: #{tpu_custom_call.1} parent=5 // pred_region
        %s423 = ssub.s32 %s18, 2
        // Predicated region
        $region61: #{tpu_custom_call.1} parent=59 // pred_check
          %p424 = pneg %p157
        $region62: #{tpu_custom_call.1} parent=59 // pred_check_branch
          %426 = sbr.rel (%p424) target = $region64
        $region63: #{tpu_custom_call.1} parent=59 // pred_region
          %s427 = sand.u32 %s142, 1
          %s428 = scalar_lea.sflag [#allocation4], %s427
          %s429 = sand.u32 %s142, 1
          %s430 = smul.addr %s429, 4
          %s431 = scalar_lea.vmem [#allocation8], %s430
          %433 = dma.done %s428, 64
        $region64: #{tpu_custom_call.1} parent=59 // pred_fallthru
          _
      $region60: #{tpu_custom_call.1} parent=5 // pred_fallthru
        _
    $region6: #{tpu_custom_call.1} parent=1 // loop_footer
      %s22 = sadd.s32 1, %s18
    $region7: #{tpu_custom_call.1} parent=1 // loop_footer_branch
      %17 = sbr.rel target = $region3
    $region8: #{tpu_custom_call.1} parent=1 // loop_exit
      _
    %434 = vsyncpa [#allocation3], 1
    %s435 = scalar_lea.sflag [#allocation3], 1
    %436 = vsyncpa %s435, 1
    %437 = vsyncpa [#allocation6], 1
    %438 = vsyncpa [#allocation4], 1
    %s439 = scalar_lea.sflag [#allocation4], 1
    %440 = vsyncpa %s439, 1

</llo_original>
